<compile_context>
chip_gen: v5e
topology: v5e:2x2
jax: 0.10.0
libtpu: 0.0.40
codegen_flags: <defaults>
</compile_context>

<pallas_src>
import functools

import jax
import jax.numpy as jnp
from jax.experimental import pallas as pl
from jax.experimental.pallas import tpu as pltpu


def conv3x3_relu_kernel(H, x_ref, w_ref, b_ref, o_ref):
    """Fused ZeroPad2d(1) + Conv3x3 + bias + ReLU.

    H:      static image height (rows per image inside the fused M axis)
    x_ref:  (N*H, W*Cin)       bf16  NHWC input rows, (W, Cin) flattened
    w_ref:  (W*Cin, 3*W*Cout)  bf16  [kh=0 | kh=1 | kh=2] banded tap matrices
                                      (kw taps + W zero padding folded in)
    b_ref:  (1, W*Cout)        f32   bias tiled across W
    o_ref:  (N*H, W*Cout)      f32   lane-dense output rows
    """
    M = x_ref.shape[0]              # M = N*H (batch fused into the matmul M dim)
    C = o_ref.shape[-1]             # C = W*Cout

    # Single MXU stream: (N*H, W*Cin) @ (W*Cin, 3*W*Cout), f32 accumulation.
    y = jnp.dot(x_ref[...], w_ref[...], preferred_element_type=jnp.float32)

    # Combine the three kh taps with +/-1-row shifted accumulation into the
    # output ref; rows that would cross an image boundary are masked out,
    # which realizes ZeroPad2d(1) along H without a padded input copy.
    row = jax.lax.broadcasted_iota(jnp.int32, (M, 1), 0)
    not_first = (row % H) != 0           # row is not the top row of its image
    not_last = (row % H) != (H - 1)      # row is not the bottom row of its image

    o_ref[...] = y[:, C:2 * C] + b_ref[...]                        # center tap + bias
    o_ref[1:, :] += jnp.where(not_first[1:], y[:M - 1, :C], 0.0)   # out[m] += y0[m-1]
    o_ref[:M - 1, :] += jnp.where(not_last[:M - 1], y[1:, 2 * C:], 0.0)  # out[m] += y2[m+1]
    o_ref[...] = jnp.maximum(o_ref[...], 0.0)                      # ReLU


def prepare_conv_block_params(weight, bias, W):
    """Fold the 3x3 kernel's kw taps + W zero padding into banded matrices.

    Runs ONCE at init (hoisted out of the per-call path).

    B[kh, w_in*Cin + cin, w*Cout + c] = weight[c, cin, kh, kw] with
    w_in = w + kw - 1; out-of-range w_in terms are dropped, realizing the
    zero padding along W inside the matmul itself.

    Returns:
      w_cat:  (W*Cin, 3*W*Cout) bf16, column blocks ordered [kh=0, kh=1, kh=2]
      b_wide: (1, W*Cout) f32
    """
    Cout, Cin, _, _ = weight.shape
    wt = jnp.transpose(weight, (2, 3, 1, 0))                    # (kh, kw, Cin, Cout)
    # S[kw, w_in, w] = 1  iff  w_in == w + kw - 1 and both in range.
    S = jnp.stack([jnp.eye(W, W, k=1 - kw, dtype=weight.dtype)
                   for kw in range(3)])                          # (3, W, W)
    B = jnp.einsum('kpw,hkic->hpiwc', S, wt)                     # (kh, w_in, Cin, w, Cout)
    B = B.reshape(3, W * Cin, W * Cout)
    w_cat = jnp.moveaxis(B, 0, 1).reshape(W * Cin, 3 * W * Cout)
    b_wide = jnp.tile(bias, W).reshape(1, W * Cout)
    return w_cat.astype(jnp.bfloat16), b_wide.astype(jnp.float32)


def conv_block_apply(x_nchw, w_cat, b_wide):
    """Per-call forward: NCHW x -> NCHW ReLU(conv3x3(zeropad(x)) + bias)."""
    N, Cin, H, W = x_nchw.shape
    WCin = W * Cin
    WCout = w_cat.shape[1] // 3
    Cout = WCout // W

    # TODO(synk): a production pipeline would take NHWC (and could emit bf16)
    # end-to-end and drop these transposes; kept to preserve the module's
    # NCHW f32 interface.
    x = jnp.transpose(x_nchw, (0, 2, 3, 1)).reshape(N * H, WCin)
    x = x.astype(jnp.bfloat16)

    # Actual (banded) MXU work, not the mathematical conv FLOPs.
    flops = 2 * (N * H) * WCin * (3 * WCout)
    bytes_accessed = (N * H * WCin * 2 + WCin * 3 * WCout * 2
                      + WCout * 4 + N * H * WCout * 4)

    out_flat = pl.pallas_call(
        functools.partial(conv3x3_relu_kernel, H),
        out_shape=jax.ShapeDtypeStruct((N * H, WCout), jnp.float32),
        grid=(1,),  # whole (tiny) problem in one step; tile N/H with a
                    # "parallel" axis when scaling (see header notes)
        in_specs=[
            pl.BlockSpec((N * H, WCin), lambda i: (0, 0)),
            pl.BlockSpec((WCin, 3 * WCout), lambda i: (0, 0)),
            pl.BlockSpec((1, WCout), lambda i: (0, 0)),
        ],
        out_specs=pl.BlockSpec((N * H, WCout), lambda i: (0, 0)),
        compiler_params=pltpu.CompilerParams(
            dimension_semantics=("arbitrary",)),
        cost_estimate=pl.CostEstimate(flops=flops, transcendentals=0,
                                      bytes_accessed=bytes_accessed),
    )(x, w_cat, b_wide)

    # (N*H, W*Cout) -> (N, H, W, Cout) -> NCHW
    return jnp.transpose(out_flat.reshape(N, H, W, Cout), (0, 3, 1, 2))


def conv_block(x_nchw, weight, bias):
    """Convenience wrapper matching the PyTorch module interface."""
    W = x_nchw.shape[-1]
    w_cat, b_wide = prepare_conv_block_params(weight, bias, W)
    return conv_block_apply(x_nchw, w_cat, b_wide)


def conv_block_ref(x_nchw, weight, bias):
    """Pure-JAX reference (lax conv) for correctness check."""
    out = jax.lax.conv_general_dilated(
        x_nchw, weight, window_strides=(1, 1), padding=((1, 1), (1, 1)),
        dimension_numbers=("NCHW", "OIHW", "NCHW"))
    out = out + bias[None, :, None, None]
    return jnp.maximum(out, 0.0)


if __name__ == "__main__":
    key = jax.random.PRNGKey(0)
    N, Cin, Cout, H, W = 2, 4, 8, 16, 16

    kx, kw_, kb = jax.random.split(key, 3)
    x = jax.random.normal(kx, (N, Cin, H, W), dtype=jnp.float32)
    # deterministic "Conv2d-like" init (uniform in +/- 1/sqrt(fan_in))
    fan_in = Cin * 3 * 3
    bound = 1.0 / (fan_in ** 0.5)
    weight = jax.random.uniform(kw_, (Cout, Cin, 3, 3), jnp.float32,
                                minval=-bound, maxval=bound)
    bias = jax.random.uniform(kb, (Cout,), jnp.float32,
                              minval=-bound, maxval=bound)

    # Weight prep happens once, outside the per-call path.
    w_cat, b_wide = jax.block_until_ready(
        prepare_conv_block_params(weight, bias, W))

    out = jax.block_until_ready(jax.jit(conv_block_apply)(x, w_cat, b_wide))
    ref = conv_block_ref(x, weight, bias)

    assert out.shape == (N, Cout, H, W)
    # bf16 MXU operands with f32 accumulation -> compare at bf16-level tol.
    assert jnp.allclose(out, ref, atol=2e-2, rtol=2e-2), \
        float(jnp.max(jnp.abs(out - ref)))

    print("KERNEL_OK")
</pallas_src>

<mosaic_0001>
module attributes {stable_mosaic.version = 11 : i64} {
  func.func @conv3x3_relu_kernel(%arg0: i32, %arg1: memref<32x64xbf16, #tpu.memory_space<vmem>>, %arg2: memref<64x384xbf16, #tpu.memory_space<vmem>>, %arg3: memref<1x128xf32, #tpu.memory_space<vmem>>, %arg4: memref<32x128xf32, #tpu.memory_space<vmem>>) attributes {dimension_semantics = [#tpu.dimension_semantics<arbitrary>], iteration_bounds = array<i64: 1>, scalar_prefetch = 0 : i64, scratch_operands = 0 : i64, tpu.core_type = #tpu.core_type<tc>, window_params = [{pipeline_mode = #tpu.pipeline_mode<synchronous>, transform_indices = @transform_0, window_bounds = array<i64: 32, 64>}, {pipeline_mode = #tpu.pipeline_mode<synchronous>, transform_indices = @transform_1, window_bounds = array<i64: 64, 384>}, {pipeline_mode = #tpu.pipeline_mode<synchronous>, transform_indices = @transform_2, window_bounds = array<i64: 1, 128>}, {pipeline_mode = #tpu.pipeline_mode<synchronous>, transform_indices = @transform_3, window_bounds = array<i64: 32, 128>}]} {
    %c0 = arith.constant 0 : index
    %c0_0 = arith.constant 0 : index
    %0 = vector.load %arg1[%c0, %c0_0] : memref<32x64xbf16, #tpu.memory_space<vmem>>, vector<32x64xbf16>
    %c0_1 = arith.constant 0 : index
    %c0_2 = arith.constant 0 : index
    %1 = vector.load %arg2[%c0_1, %c0_2] : memref<64x384xbf16, #tpu.memory_space<vmem>>, vector<64x384xbf16>
    %cst = arith.constant dense<0.000000e+00> : vector<32x384xf32>
    %2 = tpu.matmul %0, %1, %cst {dimension_numbers = #tpu.dot_dimension_numbers<[1], [0], [0], [1], [0, 0, 1, 1], [], []>} : vector<32x64xbf16>, vector<64x384xbf16>, vector<32x384xf32> -> vector<32x384xf32>
    %3 = tpu.iota {dimensions = array<i32: 0>} : vector<32x1xi32>
    %c16_i32 = arith.constant 16 : i32
    %c0_i32 = arith.constant 0 : i32
    %4 = arith.cmpi eq, %c16_i32, %c0_i32 : i32
    %c1_i32 = arith.constant 1 : i32
    %5 = arith.select %4, %c1_i32, %c16_i32 : i32
    %6 = vector.broadcast %5 : i32 to vector<32x1xi32>
    %7 = arith.remsi %3, %6 : vector<32x1xi32>
    %c0_i32_3 = arith.constant 0 : i32
    %8 = vector.broadcast %c0_i32_3 : i32 to vector<32x1xi32>
    %9 = arith.cmpi ne, %7, %8 : vector<32x1xi32>
    %c0_i32_4 = arith.constant 0 : i32
    %10 = vector.broadcast %c0_i32_4 : i32 to vector<32x1xi32>
    %11 = arith.cmpi slt, %7, %10 : vector<32x1xi32>
    %c0_i32_5 = arith.constant 0 : i32
    %12 = arith.cmpi slt, %5, %c0_i32_5 : i32
    %13 = vector.broadcast %12 : i1 to vector<32x1xi1>
    %14 = vector.broadcast %13 : vector<32x1xi1> to vector<32x1xi1>
    %15 = arith.xori %11, %14 : vector<32x1xi1>
    %16 = arith.andi %15, %9 : vector<32x1xi1>
    %17 = vector.broadcast %5 : i32 to vector<32x1xi32>
    %18 = arith.addi %7, %17 : vector<32x1xi32>
    %19 = arith.select %16, %18, %7 : vector<32x1xi1>, vector<32x1xi32>
    %c0_i32_6 = arith.constant 0 : i32
    %20 = vector.broadcast %c0_i32_6 : i32 to vector<32x1xi32>
    %21 = arith.cmpi ne, %19, %20 : vector<32x1xi32>
    %c16_i32_7 = arith.constant 16 : i32
    %c0_i32_8 = arith.constant 0 : i32
    %22 = arith.cmpi eq, %c16_i32_7, %c0_i32_8 : i32
    %c1_i32_9 = arith.constant 1 : i32
    %23 = arith.select %22, %c1_i32_9, %c16_i32_7 : i32
    %24 = vector.broadcast %23 : i32 to vector<32x1xi32>
    %25 = arith.remsi %3, %24 : vector<32x1xi32>
    %c0_i32_10 = arith.constant 0 : i32
    %26 = vector.broadcast %c0_i32_10 : i32 to vector<32x1xi32>
    %27 = arith.cmpi ne, %25, %26 : vector<32x1xi32>
    %c0_i32_11 = arith.constant 0 : i32
    %28 = vector.broadcast %c0_i32_11 : i32 to vector<32x1xi32>
    %29 = arith.cmpi slt, %25, %28 : vector<32x1xi32>
    %c0_i32_12 = arith.constant 0 : i32
    %30 = arith.cmpi slt, %23, %c0_i32_12 : i32
    %31 = vector.broadcast %30 : i1 to vector<32x1xi1>
    %32 = vector.broadcast %31 : vector<32x1xi1> to vector<32x1xi1>
    %33 = arith.xori %29, %32 : vector<32x1xi1>
    %34 = arith.andi %33, %27 : vector<32x1xi1>
    %35 = vector.broadcast %23 : i32 to vector<32x1xi32>
    %36 = arith.addi %25, %35 : vector<32x1xi32>
    %37 = arith.select %34, %36, %25 : vector<32x1xi1>, vector<32x1xi32>
    %c15_i32 = arith.constant 15 : i32
    %38 = vector.broadcast %c15_i32 : i32 to vector<32x1xi32>
    %39 = arith.cmpi ne, %37, %38 : vector<32x1xi32>
    %40 = vector.extract_strided_slice %2 {offsets = [0, 128], sizes = [32, 128], strides = [1, 1]} : vector<32x384xf32> to vector<32x128xf32>
    %c0_13 = arith.constant 0 : index
    %c0_14 = arith.constant 0 : index
    %41 = vector.load %arg3[%c0_13, %c0_14] : memref<1x128xf32, #tpu.memory_space<vmem>>, vector<1x128xf32>
    %42 = vector.broadcast %41 : vector<1x128xf32> to vector<32x128xf32>
    %43 = arith.addf %40, %42 : vector<32x128xf32>
    %c0_15 = arith.constant 0 : index
    %c0_16 = arith.constant 0 : index
    %44 = vector.load %arg4[%c0_15, %c0_16] : memref<32x128xf32, #tpu.memory_space<vmem>>, vector<32x128xf32>
    tpu.vector_store %arg4[%c0_15, %c0_16], %43 {strides = array<i32>} : memref<32x128xf32, #tpu.memory_space<vmem>>, vector<32x128xf32>,
    %c1 = arith.constant 1 : index
    %c0_17 = arith.constant 0 : index
    %45 = vector.load %arg4[%c1, %c0_17] : memref<32x128xf32, #tpu.memory_space<vmem>>, vector<31x128xf32>
    %46 = vector.extract_strided_slice %21 {offsets = [1, 0], sizes = [31, 1], strides = [1, 1]} : vector<32x1xi1> to vector<31x1xi1>
    %47 = vector.extract_strided_slice %2 {offsets = [0, 0], sizes = [31, 128], strides = [1, 1]} : vector<32x384xf32> to vector<31x128xf32>
    %cst_18 = arith.constant 0.000000e+00 : f32
    %48 = vector.shape_cast %46 : vector<31x1xi1> to vector<31x1xi1>
    %49 = vector.broadcast %48 : vector<31x1xi1> to vector<31x128xi1>
    %50 = vector.broadcast %cst_18 : f32 to vector<31x128xf32>
    %51 = arith.select %49, %47, %50 : vector<31x128xi1>, vector<31x128xf32>
    %52 = arith.addf %45, %51 : vector<31x128xf32>
    %c1_19 = arith.constant 1 : index
    %c0_20 = arith.constant 0 : index
    %53 = vector.load %arg4[%c1_19, %c0_20] : memref<32x128xf32, #tpu.memory_space<vmem>>, vector<31x128xf32>
    tpu.vector_store %arg4[%c1_19, %c0_20], %52 {strides = array<i32>} : memref<32x128xf32, #tpu.memory_space<vmem>>, vector<31x128xf32>,
    %c0_21 = arith.constant 0 : index
    %c0_22 = arith.constant 0 : index
    %54 = vector.load %arg4[%c0_21, %c0_22] : memref<32x128xf32, #tpu.memory_space<vmem>>, vector<31x128xf32>
    %55 = vector.extract_strided_slice %39 {offsets = [0, 0], sizes = [31, 1], strides = [1, 1]} : vector<32x1xi1> to vector<31x1xi1>
    %56 = vector.extract_strided_slice %2 {offsets = [1, 256], sizes = [31, 128], strides = [1, 1]} : vector<32x384xf32> to vector<31x128xf32>
    %cst_23 = arith.constant 0.000000e+00 : f32
    %57 = vector.shape_cast %55 : vector<31x1xi1> to vector<31x1xi1>
    %58 = vector.broadcast %57 : vector<31x1xi1> to vector<31x128xi1>
    %59 = vector.broadcast %cst_23 : f32 to vector<31x128xf32>
    %60 = arith.select %58, %56, %59 : vector<31x128xi1>, vector<31x128xf32>
    %61 = arith.addf %54, %60 : vector<31x128xf32>
    %c0_24 = arith.constant 0 : index
    %c0_25 = arith.constant 0 : index
    %62 = vector.load %arg4[%c0_24, %c0_25] : memref<32x128xf32, #tpu.memory_space<vmem>>, vector<31x128xf32>
    tpu.vector_store %arg4[%c0_24, %c0_25], %61 {strides = array<i32>} : memref<32x128xf32, #tpu.memory_space<vmem>>, vector<31x128xf32>,
    %c0_26 = arith.constant 0 : index
    %c0_27 = arith.constant 0 : index
    %63 = vector.load %arg4[%c0_26, %c0_27] : memref<32x128xf32, #tpu.memory_space<vmem>>, vector<32x128xf32>
    %cst_28 = arith.constant 0.000000e+00 : f32
    %64 = vector.broadcast %cst_28 : f32 to vector<32x128xf32>
    %65 = arith.maximumf %63, %64 : vector<32x128xf32>
    %c0_29 = arith.constant 0 : index
    %c0_30 = arith.constant 0 : index
    %66 = vector.load %arg4[%c0_29, %c0_30] : memref<32x128xf32, #tpu.memory_space<vmem>>, vector<32x128xf32>
    tpu.vector_store %arg4[%c0_29, %c0_30], %65 {strides = array<i32>} : memref<32x128xf32, #tpu.memory_space<vmem>>, vector<32x128xf32>,
    return
  }
  func.func @transform_0(%arg0: i32) -> (i32, i32) {
    %c0_i32 = arith.constant 0 : i32
    %c0_i32_0 = arith.constant 0 : i32
    %c0_i32_1 = arith.constant 0 : i32
    return %c0_i32, %c0_i32_0 : i32, i32
  }
  func.func @transform_1(%arg0: i32) -> (i32, i32) {
    %c0_i32 = arith.constant 0 : i32
    %c0_i32_0 = arith.constant 0 : i32
    %c0_i32_1 = arith.constant 0 : i32
    return %c0_i32, %c0_i32_0 : i32, i32
  }
  func.func @transform_2(%arg0: i32) -> (i32, i32) {
    %c0_i32 = arith.constant 0 : i32
    %c0_i32_0 = arith.constant 0 : i32
    %c0_i32_1 = arith.constant 0 : i32
    return %c0_i32, %c0_i32_0 : i32, i32
  }
  func.func @transform_3(%arg0: i32) -> (i32, i32) {
    %c0_i32 = arith.constant 0 : i32
    %c0_i32_0 = arith.constant 0 : i32
    %c0_i32_1 = arith.constant 0 : i32
    return %c0_i32, %c0_i32_0 : i32, i32
  }
}

</mosaic_0001>

<llo_original>
// kernel: conv_block_apply.1
$region0: #{conv_block_apply.1}
  #allocation0 [shape = 'u32[]', space=smem, size = 0x4, offset = 0x4, fixed_abs, tag = 'smem constant byte address 0x4 - core index']
  #allocation1 [shape = 'u32[72,128]{1,0:T(1,128)}', space=vmem, size = 0x9000, scoped, tag = 'internal scratch']
  %s0 = inlined_call_operand.vmem [shape: bf16[32,64], index: 0, kind: input, shape index: {}]
  %s1 = inlined_call_operand.vmem [shape: bf16[64,384], index: 1, kind: input, shape index: {}]
  %s2 = inlined_call_operand.vmem [shape: f32[1,128], index: 2, kind: input, shape index: {}]
  %s3 = inlined_call_operand.vmem [shape: f32[32,128], index: 3, kind: output, shape index: {}]
  %s4 = sld [smem:[#allocation0]]
  $region22: #{conv_block_apply.1} parent=0
    _
  %s6 = ssub.s32 1, %s4
  %s7 = scalar_select 0, %s6, %s4
  // Predicated region
  $region2: #{conv_block_apply.1} parent=0 // pred_check
    _
  $region3: #{conv_block_apply.1} parent=0 // pred_check_branch
    %9 = sbr.rel (0) target = $region5
  $region4: #{conv_block_apply.1} parent=0 // pred_region
    _
  $region5: #{conv_block_apply.1} parent=0 // pred_fallthru
    _
  // Predicated region
  $region6: #{conv_block_apply.1} parent=0 // pred_check
    _
  $region7: #{conv_block_apply.1} parent=0 // pred_check_branch
    %11 = sbr.rel (0) target = $region9
  $region8: #{conv_block_apply.1} parent=0 // pred_region
    _
  $region9: #{conv_block_apply.1} parent=0 // pred_fallthru
    _
  // Predicated region
  $region10: #{conv_block_apply.1} parent=0 // pred_check
    _
  $region11: #{conv_block_apply.1} parent=0 // pred_check_branch
    %13 = sbr.rel (0) target = $region13
  $region12: #{conv_block_apply.1} parent=0 // pred_region
    _
  $region13: #{conv_block_apply.1} parent=0 // pred_fallthru
    _
  %v15 = vld [vmem:[%s0] sm:$0xf]
  %v16 = vld [vmem:[%s0 + $0x4] sm:$0xf]
  %v17 = vld [vmem:[%s0 + $0x8] sm:$0xf]
  %v18 = vld [vmem:[%s0 + $0xc] sm:$0xf]
  %v19 = vld [vmem:[%s1] sm:$0xff]
  %v20 = vld [vmem:[%s1 + $0x8] sm:$0xf]
  %v21 = vld [vmem:[%s1 + $0xc] sm:$0xff]
  %v22 = vld [vmem:[%s1 + $0x14] sm:$0xf]
  %v23 = vld [vmem:[%s1 + $0x18] sm:$0xff]
  %v24 = vld [vmem:[%s1 + $0x20] sm:$0xf]
  %v25 = vld [vmem:[%s1 + $0x24] sm:$0xff]
  %v26 = vld [vmem:[%s1 + $0x2c] sm:$0xf]
  %v27 = vld [vmem:[%s1 + $0x30] sm:$0xff]
  %v28 = vld [vmem:[%s1 + $0x38] sm:$0xf]
  %v29 = vld [vmem:[%s1 + $0x3c] sm:$0xff]
  %v30 = vld [vmem:[%s1 + $0x44] sm:$0xf]
  %v31 = vld [vmem:[%s1 + $0x48] sm:$0xff]
  %v32 = vld [vmem:[%s1 + $0x50] sm:$0xf]
  %v33 = vld [vmem:[%s1 + $0x54] sm:$0xff]
  %v34 = vld [vmem:[%s1 + $0x5c] sm:$0xf]
  %v39 = vunpack.c.l.b16 %v15
  %v40 = vunpack.c.l.b16 %v16
  %v41 = vunpack.c.l.b16 %v17
  %v42 = vunpack.c.l.b16 %v18
  %v43 = vpack.c.b16 %v40, %v39
  %v44 = vpack.c.b16 %v42, %v41
  %v61 = vunpack.c.l.b16 %v19
  %v62 = vunpack.c.h.b16 %v19
  %v63 = vunpack.c.l.b16 %v20
  %v64 = vunpack.c.l.b16 %v21
  %v65 = vunpack.c.h.b16 %v21
  %v66 = vunpack.c.l.b16 %v22
  %v67 = vunpack.c.l.b16 %v23
  %v68 = vunpack.c.h.b16 %v23
  %v69 = vunpack.c.l.b16 %v24
  %v70 = vunpack.c.l.b16 %v25
  %v71 = vunpack.c.h.b16 %v25
  %v72 = vunpack.c.l.b16 %v26
  %v73 = vunpack.c.l.b16 %v27
  %v74 = vunpack.c.h.b16 %v27
  %v75 = vunpack.c.l.b16 %v28
  %v76 = vunpack.c.l.b16 %v29
  %v77 = vunpack.c.h.b16 %v29
  %v78 = vunpack.c.l.b16 %v30
  %v79 = vunpack.c.l.b16 %v31
  %v80 = vunpack.c.h.b16 %v31
  %v81 = vunpack.c.l.b16 %v32
  %v82 = vunpack.c.l.b16 %v33
  %v83 = vunpack.c.h.b16 %v33
  %v84 = vunpack.c.l.b16 %v34
  %v85 = vpack.c.b16 %v64, %v61
  %v86 = vpack.c.b16 %v65, %v62
  %v87 = vpack.c.b16 %v66, %v63
  %v88 = vpack.c.b16 %v70, %v67
  %v89 = vpack.c.b16 %v71, %v68
  %v90 = vpack.c.b16 %v72, %v69
  %v91 = vpack.c.b16 %v76, %v73
  %v92 = vpack.c.b16 %v77, %v74
  %v93 = vpack.c.b16 %v78, %v75
  %v94 = vpack.c.b16 %v82, %v79
  %v95 = vpack.c.b16 %v83, %v80
  %v96 = vpack.c.b16 %v84, %v81
  %vm109 = vcmask 523264
  %v111 = vsel %vm109, %v43, 0
  %v114 = vsel %vm109, %v44, 0
  %116 = vmatpush.bf16.msra.mxu0 0
  %117 = vmatpush.bf16.msra.mxu0 0
  %118 = vmatpush.bf16.msra.mxu0 0
  %119 = vmatpush.bf16.msra.mxu0 0
  %120 = vmatpush.bf16.msra.mxu0 %v94
  %121 = vmatpush.bf16.msra.mxu0 %v91
  %122 = vmatpush.bf16.msra.mxu0 %v88
  %123 = vmatpush.bf16.msra.mxu0 %v85
  %124 = vmatmul.bf16.gmra.mxu0 %v111
  %v125 = vpop.f32.mrf.mxu0
  %v126 = vadd.f32 0.0, %v125
  %v127 = vpop.f32.mrf.mxu0
  %v128 = vadd.f32 0.0, %v127
  %129 = vmatmul.bf16.gmra.mxu0 %v114
  %v130 = vpop.f32.mrf.mxu0
  %v131 = vadd.f32 0.0, %v130
  %v132 = vpop.f32.mrf.mxu0
  %v133 = vadd.f32 0.0, %v132
  %134 = vdwg.mxu0
  %135 = vmatpush.bf16.msra.mxu0 0
  %136 = vmatpush.bf16.msra.mxu0 0
  %137 = vmatpush.bf16.msra.mxu0 0
  %138 = vmatpush.bf16.msra.mxu0 0
  %139 = vmatpush.bf16.msra.mxu0 %v95
  %140 = vmatpush.bf16.msra.mxu0 %v92
  %141 = vmatpush.bf16.msra.mxu0 %v89
  %142 = vmatpush.bf16.msra.mxu0 %v86
  %143 = vmatmul.bf16.gmra.mxu0 %v111
  %v144 = vpop.f32.mrf.mxu0
  %v145 = vadd.f32 0.0, %v144
  %v146 = vpop.f32.mrf.mxu0
  %v147 = vadd.f32 0.0, %v146
  %148 = vmatmul.bf16.gmra.mxu0 %v114
  %v149 = vpop.f32.mrf.mxu0
  %v150 = vadd.f32 0.0, %v149
  %v151 = vpop.f32.mrf.mxu0
  %v152 = vadd.f32 0.0, %v151
  %153 = vdwg.mxu0
  %154 = vmatpush.bf16.msra.mxu0 0
  %155 = vmatpush.bf16.msra.mxu0 0
  %156 = vmatpush.bf16.msra.mxu0 0
  %157 = vmatpush.bf16.msra.mxu0 0
  %158 = vmatpush.bf16.msra.mxu0 %v96
  %159 = vmatpush.bf16.msra.mxu0 %v93
  %160 = vmatpush.bf16.msra.mxu0 %v90
  %161 = vmatpush.bf16.msra.mxu0 %v87
  %162 = vmatmul.bf16.gmra.mxu0 %v111
  %v163 = vpop.f32.mrf.mxu0
  %v164 = vadd.f32 0.0, %v163
  %v165 = vpop.f32.mrf.mxu0
  %v166 = vadd.f32 0.0, %v165
  %167 = vmatmul.bf16.gmra.mxu0 %v114
  %v168 = vpop.f32.mrf.mxu0
  %v169 = vadd.f32 0.0, %v168
  %v170 = vpop.f32.mrf.mxu0
  %v171 = vadd.f32 0.0, %v170
  %172 = vdwg.mxu0
  %v173 = vlaneseq
  %v174 = vshrl.u32 %v173, 7
  %v175 = vadd.s32 %v174, 8
  %v176 = vadd.s32 %v174, 16
  %v177 = vadd.s32 %v174, 24
  %vm178 = vcmp.lt.s32.totalorder %v174, 0
  %v179 = vsub.s32 0, %v174
  %v180 = vsel %vm178, %v179, %v174
  %v181 = vshrl.u32 %v180, 4
  %v182 = vand.u32 %v180, 15
  %v183 = vsub.s32 0, %v182
  %v184 = vsel %vm178, %v183, %v182
  %vm185 = vcmp.lt.s32.totalorder %v175, 0
  %v186 = vsub.s32 0, %v175
  %v187 = vsel %vm185, %v186, %v175
  %v188 = vshrl.u32 %v187, 4
  %v189 = vand.u32 %v187, 15
  %v190 = vsub.s32 0, %v189
  %v191 = vsel %vm185, %v190, %v189
  %vm192 = vcmp.lt.s32.totalorder %v176, 0
  %v193 = vsub.s32 0, %v176
  %v194 = vsel %vm192, %v193, %v176
  %v195 = vshrl.u32 %v194, 4
  %v196 = vand.u32 %v194, 15
  %v197 = vsub.s32 0, %v196
  %v198 = vsel %vm192, %v197, %v196
  %vm199 = vcmp.lt.s32.totalorder %v177, 0
  %v200 = vsub.s32 0, %v177
  %v201 = vsel %vm199, %v200, %v177
  %v202 = vshrl.u32 %v201, 4
  %v203 = vand.u32 %v201, 15
  %v204 = vsub.s32 0, %v203
  %v205 = vsel %vm199, %v204, %v203
  %vm206 = vcmp.ne.s32.totalorder %v184, 0
  %vm207 = vcmp.ne.s32.totalorder %v191, 0
  %vm208 = vcmp.ne.s32.totalorder %v198, 0
  %vm209 = vcmp.ne.s32.totalorder %v205, 0
  %vm210 = vcmp.lt.s32.totalorder %v184, 0
  %vm211 = vcmp.lt.s32.totalorder %v191, 0
  %vm212 = vcmp.lt.s32.totalorder %v198, 0
  %vm213 = vcmp.lt.s32.totalorder %v205, 0
  %vm214 = vmand %vm210, %vm206
  %vm215 = vmand %vm211, %vm207
  %vm216 = vmand %vm212, %vm208
  %vm217 = vmand %vm213, %vm209
  %v218 = vadd.s32 %v184, 16
  %v219 = vadd.s32 %v191, 16
  %v220 = vadd.s32 %v198, 16
  %v221 = vadd.s32 %v205, 16
  %v222 = vsel %vm214, %v218, %v184
  %v223 = vsel %vm215, %v219, %v191
  %v224 = vsel %vm216, %v220, %v198
  %v225 = vsel %vm217, %v221, %v205
  %vm226 = vcmp.ne.s32.totalorder %v222, 0
  %vm227 = vcmp.ne.s32.totalorder %v223, 0
  %vm228 = vcmp.ne.s32.totalorder %v224, 0
  %vm229 = vcmp.ne.s32.totalorder %v225, 0
  %vm230 = vcmp.ne.s32.totalorder %v222, 15
  %vm231 = vcmp.ne.s32.totalorder %v223, 15
  %vm232 = vcmp.ne.s32.totalorder %v224, 15
  %vm233 = vcmp.ne.s32.totalorder %v225, 15
  %v234 = vld [vmem:[%s2] sm:$0x1]
  %v236 = vperm.slane %v234, 0
  %v238 = vadd.f32 %v145, %v236
  %v239 = vadd.f32 %v147, %v236
  %v240 = vadd.f32 %v150, %v236
  %v241 = vadd.f32 %v152, %v236
  %242 = vst [vmem:[%s3] sm:$0xff] %v238
  %243 = vst [vmem:[%s3 + $0x8] sm:$0xff] %v239
  %244 = vst [vmem:[%s3 + $0x10] sm:$0xff] %v240
  %245 = vst [vmem:[%s3 + $0x18] sm:$0xff] %v241
  %v246 = vld [vmem:[%s3 + $0x1] sm:$0xff]
  %v247 = vld [vmem:[%s3 + $0x9] sm:$0xff]
  %v248 = vld [vmem:[%s3 + $0x11] sm:$0xff]
  %v249 = vld [vmem:[%s3 + $0x19] sm:$0x7f]
  %v250 = vsel %vm226, 1, 0
  %v251 = vsel %vm227, 1, 0
  %v252 = vsel %vm228, 1, 0
  %v253 = vsel %vm229, 1, 0
  %vm254 = vcmp.eq.s32.totalorder %v250, 1
  %vm255 = vcmp.eq.s32.totalorder %v251, 1
  %vm256 = vcmp.eq.s32.totalorder %v252, 1
  %vm257 = vcmp.eq.s32.totalorder %v253, 1
  %vm262 = vcmask 1040384
  %v263 = vrot.slane %v126, 7
  %v264 = vrot.slane %v128, 7
  %v265 = vsel %vm262, %v263, %v264
  %v266 = vrot.slane %v131, 7
  %v267 = vsel %vm262, %v264, %v266
  %v268 = vrot.slane %v133, 7
  %v269 = vsel %vm262, %v266, %v268
  %v274 = vsel %vm254, %v263, 0.0
  %v275 = vsel %vm255, %v265, 0.0
  %v276 = vsel %vm256, %v267, 0.0
  %v277 = vsel %vm257, %v269, 0.0
  %vm282 = vcmask 1046528
  %v283 = vrot.slane %v274, 1
  %v284 = vrot.slane %v275, 1
  %v285 = vsel %vm282, %v283, %v284
  %v286 = vrot.slane %v276, 1
  %v287 = vsel %vm282, %v284, %v286
  %v288 = vrot.slane %v277, 1
  %v289 = vsel %vm282, %v286, %v288
  %v294 = vadd.f32 %v246, %v285
  %v295 = vadd.f32 %v247, %v287
  %v296 = vadd.f32 %v248, %v289
  %v297 = vadd.f32 %v249, %v288
  %298 = vst [vmem:[%s3 + $0x1] sm:$0xff] %v294
  %299 = vst [vmem:[%s3 + $0x9] sm:$0xff] %v295
  %300 = vst [vmem:[%s3 + $0x11] sm:$0xff] %v296
  %301 = vst [vmem:[%s3 + $0x19] sm:$0x7f] %v297
  %v302 = vld [vmem:[%s3] sm:$0xff]
  %v303 = vld [vmem:[%s3 + $0x8] sm:$0xff]
  %v304 = vld [vmem:[%s3 + $0x10] sm:$0xff]
  %v305 = vld [vmem:[%s3 + $0x18] sm:$0x7f]
  %v306 = vsel %vm230, 1, 0
  %v307 = vsel %vm231, 1, 0
  %v308 = vsel %vm232, 1, 0
  %v309 = vsel %vm233, 1, 0
  %vm310 = vcmp.eq.s32.totalorder %v306, 1
  %vm311 = vcmp.eq.s32.totalorder %v307, 1
  %vm312 = vcmp.eq.s32.totalorder %v308, 1
  %vm313 = vcmp.eq.s32.totalorder %v309, 1
  %v318 = vrot.slane %v164, 1
  %v319 = vrot.slane %v166, 1
  %v320 = vsel %vm282, %v318, %v319
  %v321 = vrot.slane %v169, 1
  %v322 = vsel %vm282, %v319, %v321
  %v323 = vrot.slane %v171, 1
  %v324 = vsel %vm282, %v321, %v323
  %v329 = vsel %vm310, %v320, 0.0
  %v330 = vsel %vm311, %v322, 0.0
  %v331 = vsel %vm312, %v324, 0.0
  %v332 = vsel %vm313, %v323, 0.0
  %v333 = vadd.f32 %v302, %v329
  %v334 = vadd.f32 %v303, %v330
  %v335 = vadd.f32 %v304, %v331
  %v336 = vadd.f32 %v305, %v332
  %337 = vst [vmem:[%s3] sm:$0xff] %v333
  %338 = vst [vmem:[%s3 + $0x8] sm:$0xff] %v334
  %339 = vst [vmem:[%s3 + $0x10] sm:$0xff] %v335
  %340 = vst [vmem:[%s3 + $0x18] sm:$0x7f] %v336
  %v341 = vld [vmem:[%s3] sm:$0xff]
  %v342 = vld [vmem:[%s3 + $0x8] sm:$0xff]
  %v343 = vld [vmem:[%s3 + $0x10] sm:$0xff]
  %v344 = vld [vmem:[%s3 + $0x18] sm:$0xff]
  %v345 = vmax.f32 %v341, 0.0
  %v346 = vmax.f32 %v342, 0.0
  %v347 = vmax.f32 %v343, 0.0
  %v348 = vmax.f32 %v344, 0.0
  %349 = vst [vmem:[%s3] sm:$0xff] %v345
  %350 = vst [vmem:[%s3 + $0x8] sm:$0xff] %v346
  %351 = vst [vmem:[%s3 + $0x10] sm:$0xff] %v347
  %352 = vst [vmem:[%s3 + $0x18] sm:$0xff] %v348
  // Predicated region
  $region14: #{conv_block_apply.1} parent=0 // pred_check
    _
  $region15: #{conv_block_apply.1} parent=0 // pred_check_branch
    %354 = sbr.rel (0) target = $region17
  $region16: #{conv_block_apply.1} parent=0 // pred_region
    _
  $region17: #{conv_block_apply.1} parent=0 // pred_fallthru
    _
  // Predicated region
  $region18: #{conv_block_apply.1} parent=0 // pred_check
    _
  $region19: #{conv_block_apply.1} parent=0 // pred_check_branch
    %356 = sbr.rel (0) target = $region21
  $region20: #{conv_block_apply.1} parent=0 // pred_region
    _
  $region21: #{conv_block_apply.1} parent=0 // pred_fallthru
    _

</llo_original>
